<compile_context>
chip_gen: v6e
topology: v6e:2x2x1
jax: 0.10.0
libtpu: 0.0.40
codegen_flags: <defaults>
</compile_context>

<pallas_src>
import functools

import jax
import jax.numpy as jnp
from jax.experimental import pallas as pl
from jax.experimental.pallas import tpu as pltpu


def _dice_sums_kernel(pred_ref, teacher_ref, inter_ref, pt_ref, *,
                      hw, chunk, steps_per_core, may_mask):
    k = pl.program_id(1)  # spatial reduction step ("arbitrary")

    @pl.when(k == 0)
    def _():
        inter_ref[...] = jnp.zeros_like(inter_ref)
        pt_ref[...] = jnp.zeros_like(pt_ref)

    # .float() in the reference.
    p = pred_ref[...].astype(jnp.float32)      # (rows, chunk)
    t = teacher_ref[...].astype(jnp.float32)   # (rows, chunk)

    def accumulate(p, t):
        inter_ref[...] += jnp.sum(p * t, axis=-1, keepdims=True)
        pt_ref[...] += jnp.sum(p + t, axis=-1, keepdims=True)

    if may_mask:
        # Only the ragged last spatial block (and any padded out-of-range
        # step introduced by the per-core split) pays for the mask.
        g = pl.program_id(0) * steps_per_core + k       # global spatial step
        needs_mask = (g + 1) * chunk > hw

        @pl.when(needs_mask)
        def _():
            lane = jax.lax.broadcasted_iota(jnp.int32, p.shape, 1)
            valid = lane < (hw - g * chunk)
            # jnp.where, not a 0/1 multiply: padded VMEM garbage may be
            # NaN/Inf and 0 * NaN would leak into the sums.
            accumulate(jnp.where(valid, p, 0.0), jnp.where(valid, t, 0.0))

        @pl.when(jnp.logical_not(needs_mask))
        def _():
            accumulate(p, t)
    else:
        accumulate(p, t)


def _hw_params():
    """Generation-gated tuning: (parallel_cores, vmem_budget, vmem_limit)."""
    ncores, budget, limit = 1, 20 * 1024 * 1024, 32 * 1024 * 1024  # safe default
    try:
        kind = jax.devices()[0].device_kind.lower()
    except Exception:
        return ncores, budget, limit
    if "7" in kind:
        # v7x: 2 TensorCores/chip, only 64 MiB VMEM per core -> keep the
        # per-core double-buffered footprint small, shard across both TCs.
        return 2, 24 * 1024 * 1024, 32 * 1024 * 1024
    if "v5" in kind or "v6" in kind:
        # v5e / v6e: 1 TC, 128 MiB VMEM -> large pipeline budget amortizes
        # per-step overhead (v5e's 16 MiB scoped default needs the override).
        return 1, 64 * 1024 * 1024, 96 * 1024 * 1024
    return ncores, budget, limit


def _pick_chunk(rows, hw, vmem_budget_bytes, bytes_per_elem):
    """Largest lane tile (multiple of 128) whose double-buffered input
    footprint (2 pipeline buffers x rows x chunk x bytes_per_elem) fits."""
    if hw <= 128:
        return hw  # block equals the full spatial extent
    cap = vmem_budget_bytes // (2 * rows * bytes_per_elem)
    cap = max(128, (cap // 128) * 128)
    return min(cap, (hw // 128) * 128)     # never exceed the array extent


def dice_per_class_loss(pred, teacher, smooth=1.0):
    """Pallas implementation of DICEPerClassLoss.forward.

    pred, teacher: (B, C, *spatial) arrays (any trailing spatial dims).
    Returns a float32 scalar.
    """
    assert pred.shape == teacher.shape
    B, C = pred.shape[0], pred.shape[1]
    bc = B * C

    # Keep bf16 inputs as-is (halves HBM traffic; kernel upcasts), else f32.
    def _as_kernel_dtype(x):
        if x.dtype in (jnp.bfloat16, jnp.float32):
            return x
        return x.astype(jnp.float32)

    pred_k = _as_kernel_dtype(pred)
    teacher_k = _as_kernel_dtype(teacher)

    hw = 1
    for d in pred.shape[2:]:
        hw *= d

    # Pack rows when B*C is too small to fill the 8 sublanes of a vreg / DMA
    # row; the extra R factor is reduced away in the finalize.
    R = 1
    if bc < 8 and hw >= 1024:
        for cand in (2, 4, 8, 16):
            if bc * cand >= 8 and hw % (cand * 128) == 0:
                R = cand
                break
    rows = bc * R
    hw_p = hw // R

    pred_f = pred_k.reshape(rows, hw_p)       # bitcast reshape, no HBM copy
    teacher_f = teacher_k.reshape(rows, hw_p)

    ncores, vmem_budget, vmem_limit = _hw_params()
    bytes_per_elem = pred_f.dtype.itemsize + teacher_f.dtype.itemsize
    chunk = _pick_chunk(rows, hw_p, vmem_budget, bytes_per_elem)

    nblocks = pl.cdiv(hw_p, chunk)            # valid spatial blocks
    ncores = max(1, min(ncores, nblocks))
    spc = pl.cdiv(nblocks, ncores)            # reduction steps per core
    may_mask = (hw_p % chunk != 0) or (ncores * spc > nblocks)

    def in_index_map(c, k):
        # Clamp padded per-core steps (ncores*spc may exceed nblocks); such
        # steps are fully masked out inside the kernel.
        return (0, jnp.minimum(c * spc + k, nblocks - 1))

    bytes_in = (pred_f.size * pred_f.dtype.itemsize
                + teacher_f.size * teacher_f.dtype.itemsize)
    cost = pl.CostEstimate(flops=4 * pred_f.size, transcendentals=0,
                           bytes_accessed=bytes_in + 2 * ncores * rows * 4)

    inter, pt = pl.pallas_call(
        functools.partial(_dice_sums_kernel, hw=hw_p, chunk=chunk,
                          steps_per_core=spc, may_mask=may_mask),
        out_shape=(jax.ShapeDtypeStruct((ncores, rows, 1), jnp.float32),
                   jax.ShapeDtypeStruct((ncores, rows, 1), jnp.float32)),
        grid_spec=pltpu.PrefetchScalarGridSpec(
            num_scalar_prefetch=0,
            grid=(ncores, spc),
            in_specs=[
                pl.BlockSpec((rows, chunk), in_index_map),
                pl.BlockSpec((rows, chunk), in_index_map),
            ],
            out_specs=[
                pl.BlockSpec((None, rows, 1), lambda c, k: (c, 0, 0)),
                pl.BlockSpec((None, rows, 1), lambda c, k: (c, 0, 0)),
            ],
        ),
        compiler_params=pltpu.CompilerParams(
            dimension_semantics=("parallel", "arbitrary"),
            vmem_limit_bytes=vmem_limit),
        cost_estimate=cost,
    )(pred_f, teacher_f)

    # Tiny O(B*C) finalize in plain JAX: sum per-core shards and packed rows,
    # then dice + class existence.
    inter = inter.sum(axis=0).reshape(B, C, R).sum(axis=-1)
    pt = pt.sum(axis=0).reshape(B, C, R).sum(axis=-1)
    # NOTE: if every class is empty in every batch element, num_existence == 0
    # and the division yields NaN/Inf, matching the PyTorch reference.
    num_existence = jnp.sum(jnp.any(pt > 0.0, axis=0).astype(jnp.float32))
    dice = (2.0 * inter + smooth) / (pt + smooth)
    return jnp.sum(1.0 - dice) / num_existence


def _reference(pred, teacher, smooth=1.0):
    """Pure-JAX reference mirroring the PyTorch forward."""
    pred = pred.astype(jnp.float32)
    teacher = teacher.astype(jnp.float32)
    axes = tuple(range(2, pred.ndim))
    intersection = jnp.sum(pred * teacher, axis=axes)
    B, C = pred.shape[0], pred.shape[1]
    p = pred.reshape(B, C, -1)
    t = teacher.reshape(B, C, -1)
    pred_sum = p.sum(-1)
    teacher_sum = t.sum(-1)
    num_existence = jnp.sum(
        jnp.any(pred_sum + teacher_sum > 0, axis=0).astype(jnp.float32))
    dice = (2.0 * intersection + smooth) / (pred_sum + teacher_sum + smooth)
    return jnp.sum(1.0 - dice) / num_existence


if __name__ == "__main__":
    key = jax.random.PRNGKey(0)
    kp, kt = jax.random.split(key)

    # Primary example: (B, C, H, W) = (2, 4, 16, 16).
    B, C, H, W = 2, 4, 16, 16
    pred = jax.random.uniform(kp, (B, C, H, W), dtype=jnp.float32)
    teacher = (jax.random.uniform(kt, (B, C, H, W)) > 0.5).astype(jnp.float32)
    # Zero one class in both tensors so num_existence < C is exercised.
    pred = pred.at[:, 3].set(0.0)
    teacher = teacher.at[:, 3].set(0.0)

    loss_fn = jax.jit(dice_per_class_loss)
    loss = jax.block_until_ready(loss_fn(pred, teacher))
    ref = _reference(pred, teacher, smooth=1.0)
    assert jnp.allclose(loss, ref, rtol=1e-5, atol=1e-5), (loss, ref)

    # Extra coverage: ragged spatial tail (hw not a multiple of the lane tile).
    kp2, kt2 = jax.random.split(jax.random.PRNGKey(1))
    pred2 = jax.random.uniform(kp2, (2, 4, 18, 18), dtype=jnp.float32)
    teacher2 = (jax.random.uniform(kt2, (2, 4, 18, 18)) > 0.5).astype(jnp.float32)
    loss2 = jax.block_until_ready(jax.jit(dice_per_class_loss)(pred2, teacher2))
    assert jnp.allclose(loss2, _reference(pred2, teacher2),
                        rtol=1e-5, atol=1e-5), (loss2,)

    # Extra coverage: small B*C -> sublane row-packing path.
    kp3, kt3 = jax.random.split(jax.random.PRNGKey(2))
    pred3 = jax.random.uniform(kp3, (1, 2, 32, 32), dtype=jnp.float32)
    teacher3 = (jax.random.uniform(kt3, (1, 2, 32, 32)) > 0.5).astype(jnp.float32)
    loss3 = jax.block_until_ready(jax.jit(dice_per_class_loss)(pred3, teacher3))
    assert jnp.allclose(loss3, _reference(pred3, teacher3),
                        rtol=1e-5, atol=1e-5), (loss3,)

    print("KERNEL_OK")
</pallas_src>

<mosaic_0001>
module attributes {stable_mosaic.version = 11 : i64} {
  func.func @_dice_sums_kernel(%arg0: i32, %arg1: i32, %arg2: memref<8x256xf32, #tpu.memory_space<vmem>>, %arg3: memref<8x256xf32, #tpu.memory_space<vmem>>, %arg4: memref<1x8x1xf32, #tpu.memory_space<vmem>>, %arg5: memref<1x8x1xf32, #tpu.memory_space<vmem>>) attributes {dimension_semantics = [#tpu.dimension_semantics<parallel>, #tpu.dimension_semantics<arbitrary>], iteration_bounds = array<i64: 1, 1>, scalar_prefetch = 0 : i64, scratch_operands = 0 : i64, tpu.core_type = #tpu.core_type<tc>, window_params = [{transform_indices = @transform_0, window_bounds = array<i64: 8, 256>}, {transform_indices = @transform_1, window_bounds = array<i64: 8, 256>}, {transform_indices = @transform_2, window_bounds = array<i64: 1, 8, 1>}, {transform_indices = @transform_3, window_bounds = array<i64: 1, 8, 1>}]} {
    %c0_i32 = arith.constant 0 : i32
    %0 = arith.cmpi eq, %arg1, %c0_i32 : i32
    %1 = arith.extui %0 : i1 to i32
    %c0_i32_0 = arith.constant 0 : i32
    %2 = arith.cmpi ne, %1, %c0_i32_0 : i32
    scf.if %2 {
      %cst_17 = arith.constant 0.000000e+00 : f32
      %23 = vector.broadcast %cst_17 : f32 to vector<8x1xf32>
      %c0_18 = arith.constant 0 : index
      %c0_19 = arith.constant 0 : index
      %c0_20 = arith.constant 0 : index
      %24 = vector.load %arg4[%c0_18, %c0_19, %c0_20] : memref<1x8x1xf32, #tpu.memory_space<vmem>>, vector<1x8x1xf32>
      %25 = vector.shape_cast %24 : vector<1x8x1xf32> to vector<8x1xf32>
      %26 = vector.shape_cast %23 : vector<8x1xf32> to vector<1x8x1xf32>
      tpu.vector_store %arg4[%c0_18, %c0_19, %c0_20], %26 {strides = array<i32>} : memref<1x8x1xf32, #tpu.memory_space<vmem>>, vector<1x8x1xf32>,
      %cst_21 = arith.constant 0.000000e+00 : f32
      %27 = vector.broadcast %cst_21 : f32 to vector<8x1xf32>
      %c0_22 = arith.constant 0 : index
      %c0_23 = arith.constant 0 : index
      %c0_24 = arith.constant 0 : index
      %28 = vector.load %arg5[%c0_22, %c0_23, %c0_24] : memref<1x8x1xf32, #tpu.memory_space<vmem>>, vector<1x8x1xf32>
      %29 = vector.shape_cast %28 : vector<1x8x1xf32> to vector<8x1xf32>
      %30 = vector.shape_cast %27 : vector<8x1xf32> to vector<1x8x1xf32>
      tpu.vector_store %arg5[%c0_22, %c0_23, %c0_24], %30 {strides = array<i32>} : memref<1x8x1xf32, #tpu.memory_space<vmem>>, vector<1x8x1xf32>,
    } else {
    }
    %c0 = arith.constant 0 : index
    %c0_1 = arith.constant 0 : index
    %3 = vector.load %arg2[%c0, %c0_1] : memref<8x256xf32, #tpu.memory_space<vmem>>, vector<8x256xf32>
    %c0_2 = arith.constant 0 : index
    %c0_3 = arith.constant 0 : index
    %4 = vector.load %arg3[%c0_2, %c0_3] : memref<8x256xf32, #tpu.memory_space<vmem>>, vector<8x256xf32>
    %c0_4 = arith.constant 0 : index
    %c0_5 = arith.constant 0 : index
    %c0_6 = arith.constant 0 : index
    %5 = vector.load %arg4[%c0_4, %c0_5, %c0_6] : memref<1x8x1xf32, #tpu.memory_space<vmem>>, vector<1x8x1xf32>
    %6 = vector.shape_cast %5 : vector<1x8x1xf32> to vector<8x1xf32>
    %7 = arith.mulf %3, %4 : vector<8x256xf32>
    %cst = arith.constant dense<0.000000e+00> : vector<8xf32>
    %8 = vector.multi_reduction <add>, %7, %cst [1] : vector<8x256xf32> to vector<8xf32>
    %9 = vector.shape_cast %8 : vector<8xf32> to vector<8x1xf32>
    %10 = arith.addf %6, %9 : vector<8x1xf32>
    %c0_7 = arith.constant 0 : index
    %c0_8 = arith.constant 0 : index
    %c0_9 = arith.constant 0 : index
    %11 = vector.load %arg4[%c0_7, %c0_8, %c0_9] : memref<1x8x1xf32, #tpu.memory_space<vmem>>, vector<1x8x1xf32>
    %12 = vector.shape_cast %11 : vector<1x8x1xf32> to vector<8x1xf32>
    %13 = vector.shape_cast %10 : vector<8x1xf32> to vector<1x8x1xf32>
    tpu.vector_store %arg4[%c0_7, %c0_8, %c0_9], %13 {strides = array<i32>} : memref<1x8x1xf32, #tpu.memory_space<vmem>>, vector<1x8x1xf32>,
    %c0_10 = arith.constant 0 : index
    %c0_11 = arith.constant 0 : index
    %c0_12 = arith.constant 0 : index
    %14 = vector.load %arg5[%c0_10, %c0_11, %c0_12] : memref<1x8x1xf32, #tpu.memory_space<vmem>>, vector<1x8x1xf32>
    %15 = vector.shape_cast %14 : vector<1x8x1xf32> to vector<8x1xf32>
    %16 = arith.addf %3, %4 : vector<8x256xf32>
    %cst_13 = arith.constant dense<0.000000e+00> : vector<8xf32>
    %17 = vector.multi_reduction <add>, %16, %cst_13 [1] : vector<8x256xf32> to vector<8xf32>
    %18 = vector.shape_cast %17 : vector<8xf32> to vector<8x1xf32>
    %19 = arith.addf %15, %18 : vector<8x1xf32>
    %c0_14 = arith.constant 0 : index
    %c0_15 = arith.constant 0 : index
    %c0_16 = arith.constant 0 : index
    %20 = vector.load %arg5[%c0_14, %c0_15, %c0_16] : memref<1x8x1xf32, #tpu.memory_space<vmem>>, vector<1x8x1xf32>
    %21 = vector.shape_cast %20 : vector<1x8x1xf32> to vector<8x1xf32>
    %22 = vector.shape_cast %19 : vector<8x1xf32> to vector<1x8x1xf32>
    tpu.vector_store %arg5[%c0_14, %c0_15, %c0_16], %22 {strides = array<i32>} : memref<1x8x1xf32, #tpu.memory_space<vmem>>, vector<1x8x1xf32>,
    return
  }
  func.func @transform_0(%arg0: i32, %arg1: i32) -> (i32, i32) {
    %c1_i32 = arith.constant 1 : i32
    %0 = arith.muli %arg0, %c1_i32 : i32
    %1 = arith.addi %0, %arg1 : i32
    %c0_i32 = arith.constant 0 : i32
    %2 = arith.minsi %1, %c0_i32 : i32
    %c0_i32_0 = arith.constant 0 : i32
    %c0_i32_1 = arith.constant 0 : i32
    return %c0_i32_0, %2 : i32, i32
  }
  func.func @transform_1(%arg0: i32, %arg1: i32) -> (i32, i32) {
    %c1_i32 = arith.constant 1 : i32
    %0 = arith.muli %arg0, %c1_i32 : i32
    %1 = arith.addi %0, %arg1 : i32
    %c0_i32 = arith.constant 0 : i32
    %2 = arith.minsi %1, %c0_i32 : i32
    %c0_i32_0 = arith.constant 0 : i32
    %c0_i32_1 = arith.constant 0 : i32
    return %c0_i32_0, %2 : i32, i32
  }
  func.func @transform_2(%arg0: i32, %arg1: i32) -> (i32, i32, i32) {
    %c0_i32 = arith.constant 0 : i32
    %c0_i32_0 = arith.constant 0 : i32
    %c0_i32_1 = arith.constant 0 : i32
    return %arg0, %c0_i32, %c0_i32_0 : i32, i32, i32
  }
  func.func @transform_3(%arg0: i32, %arg1: i32) -> (i32, i32, i32) {
    %c0_i32 = arith.constant 0 : i32
    %c0_i32_0 = arith.constant 0 : i32
    %c0_i32_1 = arith.constant 0 : i32
    return %arg0, %c0_i32, %c0_i32_0 : i32, i32, i32
  }
}

</mosaic_0001>

<llo_original>
// kernel: dice_per_class_loss.1
$region0: #{dice_per_class_loss.1}
  #allocation0 [shape = 'u32[]', space=smem, size = 0x4, offset = 0x4, fixed_abs, tag = 'smem constant byte address 0x4 - core index']
  #allocation1 [shape = 'u32[144,128]{1,0:T(1,128)}', space=vmem, size = 0x12000, scoped, tag = 'internal scratch']
  %s0 = inlined_call_operand.vmem [shape: f32[8,256], index: 0, kind: input, shape index: {}]
  %s1 = inlined_call_operand.vmem [shape: f32[8,256], index: 1, kind: input, shape index: {}]
  %s2 = inlined_call_operand.vmem [shape: f32[1,8,1], index: 2, kind: output, shape index: {0}]
  %s3 = inlined_call_operand.vmem [shape: f32[1,8,1], index: 3, kind: output, shape index: {1}]
  %4 = xla_tuple %s2, %s3
  %s5 = sld [smem:[#allocation0]]
  $region30: #{dice_per_class_loss.1} parent=0
    _
  %s7 = ssub.s32 1, %s5
  %s8 = scalar_select 0, %s7, %s5
  // Predicated region
  $region2: #{dice_per_class_loss.1} parent=0 // pred_check
    _
  $region3: #{dice_per_class_loss.1} parent=0 // pred_check_branch
    %10 = sbr.rel (0) target = $region5
  $region4: #{dice_per_class_loss.1} parent=0 // pred_region
    %s11 = sadd.s32 0, 0
    %p12 = scmp.lt.s32.totalorder %s11, 0
    %s13 = scalar_select %p12, %s11, 0
    %s14 = smul.u32 2, %s13
    %p15 = scmp.lt.s32.totalorder %s14, 1
    %s16 = scalar_select %p15, %s14, 1
    %s17 = smul.addr %s16, 8
    %s18 = scalar_lea.vmem %s0, %s17
    %s19 = sadd.s32 0, 0
    %p20 = scmp.lt.s32.totalorder %s19, 0
    %s21 = scalar_select %p20, %s19, 0
    %s22 = smul.u32 2, %s21
  $region5: #{dice_per_class_loss.1} parent=0 // pred_fallthru
    _
  // Predicated region
  $region6: #{dice_per_class_loss.1} parent=0 // pred_check
    _
  $region7: #{dice_per_class_loss.1} parent=0 // pred_check_branch
    %24 = sbr.rel (0) target = $region9
  $region8: #{dice_per_class_loss.1} parent=0 // pred_region
    %s25 = sadd.s32 0, 0
    %p26 = scmp.lt.s32.totalorder %s25, 0
    %s27 = scalar_select %p26, %s25, 0
    %s28 = smul.u32 2, %s27
    %p29 = scmp.lt.s32.totalorder %s28, 1
    %s30 = scalar_select %p29, %s28, 1
    %s31 = smul.addr %s30, 8
    %s32 = scalar_lea.vmem %s1, %s31
    %s33 = sadd.s32 0, 0
    %p34 = scmp.lt.s32.totalorder %s33, 0
    %s35 = scalar_select %p34, %s33, 0
    %s36 = smul.u32 2, %s35
  $region9: #{dice_per_class_loss.1} parent=0 // pred_fallthru
    _
  %s37 = sadd.s32 0, 0
  %p38 = scmp.lt.s32.totalorder %s37, 0
  %s39 = scalar_select %p38, %s37, 0
  %s40 = smul.u32 2, %s39
  %p41 = scmp.lt.s32.totalorder %s40, 1
  %s42 = scalar_select %p41, %s40, 1
  %s43 = smul.addr %s42, 8
  %s44 = scalar_lea.vmem %s0, %s43
  %s45 = sadd.s32 0, 0
  %p46 = scmp.lt.s32.totalorder %s45, 0
  %s47 = scalar_select %p46, %s45, 0
  %s48 = smul.u32 2, %s47
  %p49 = scmp.lt.s32.totalorder %s48, 1
  %s50 = scalar_select %p49, %s48, 1
  %s51 = smul.addr %s50, 8
  %s52 = scalar_lea.vmem %s1, %s51
  %s53 = sadd.s32 0, 0
  %p54 = scmp.lt.s32.totalorder %s53, 0
  %s55 = scalar_select %p54, %s53, 0
  %s56 = smul.u32 2, %s55
  %p57 = scmp.lt.s32.totalorder %s56, 1
  %s58 = scalar_select %p57, %s56, 1
  %s59 = smul.addr %s58, 8
  %s60 = scalar_lea.vmem %s0, %s59
  %s61 = sadd.s32 0, 0
  %p62 = scmp.lt.s32.totalorder %s61, 0
  %s63 = scalar_select %p62, %s61, 0
  %s64 = smul.u32 2, %s63
  %s65 = sadd.s32 0, 0
  %p66 = scmp.lt.s32.totalorder %s65, 0
  %s67 = scalar_select %p66, %s65, 0
  %s68 = smul.u32 2, %s67
  %p69 = scmp.lt.s32.totalorder %s68, 1
  %s70 = scalar_select %p69, %s68, 1
  %s71 = smul.addr %s70, 8
  %s72 = scalar_lea.vmem %s1, %s71
  %s73 = sadd.s32 0, 0
  %p74 = scmp.lt.s32.totalorder %s73, 0
  %s75 = scalar_select %p74, %s73, 0
  %s76 = smul.u32 2, %s75
  %p77 = scmp.eq.s32.totalorder 0, 0
  // Predicated region
  $region10: #{dice_per_class_loss.1} parent=0 // pred_check
    %p78 = pneg %p77
  $region11: #{dice_per_class_loss.1} parent=0 // pred_check_branch
    %80 = sbr.rel (%p78) target = $region13
  $region12: #{dice_per_class_loss.1} parent=0 // pred_region
    %vm81 = vcmask 7168
    %82 = vst.msk [vmem:[%s2] sm:$0xff] %vm81, 0.0
    %83 = vst.msk [vmem:[%s3] sm:$0xff] %vm81, 0.0
  $region13: #{dice_per_class_loss.1} parent=0 // pred_fallthru
    _
  %v84 = vld [vmem:[%s60] sm:$0xff]
  %v85 = vld [vmem:[%s60 + $0x8] sm:$0xff]
  %v86 = vld [vmem:[%s72] sm:$0xff]
  %v87 = vld [vmem:[%s72 + $0x8] sm:$0xff]
  %v88 = vld [vmem:[%s2] sm:$0xff]
  %v89 = vmul.f32 %v84, %v86
  %v90 = vmul.f32 %v85, %v87
  %v91 = vadd.f32 %v89, %v90
  %92 = vadd.xlane.f32.xlu0 %v91
  %v93 = vpop.xlane.xlu0 %92
  %v94 = vadd.f32 %v88, %v93
  %vm95 = vcmask 7168
  %96 = vst.msk [vmem:[%s2] sm:$0xff] %vm95, %v94
  %v97 = vld [vmem:[%s3] sm:$0xff]
  %v98 = vadd.f32 %v84, %v86
  %v99 = vadd.f32 %v85, %v87
  %v100 = vadd.f32 %v98, %v99
  %101 = vadd.xlane.f32.xlu0 %v100
  %v102 = vpop.xlane.xlu0 %101
  %v103 = vadd.f32 %v97, %v102
  %104 = vst.msk [vmem:[%s3] sm:$0xff] %vm95, %v103
  // Predicated region
  $region14: #{dice_per_class_loss.1} parent=0 // pred_check
    _
  $region15: #{dice_per_class_loss.1} parent=0 // pred_check_branch
    %106 = sbr.rel (0) target = $region17
  $region16: #{dice_per_class_loss.1} parent=0 // pred_region
    _
  $region17: #{dice_per_class_loss.1} parent=0 // pred_fallthru
    _
  // Predicated region
  $region18: #{dice_per_class_loss.1} parent=0 // pred_check
    _
  $region19: #{dice_per_class_loss.1} parent=0 // pred_check_branch
    %108 = sbr.rel (0) target = $region21
  $region20: #{dice_per_class_loss.1} parent=0 // pred_region
    _
  $region21: #{dice_per_class_loss.1} parent=0 // pred_fallthru
    _
  // Predicated region
  $region22: #{dice_per_class_loss.1} parent=0 // pred_check
    _
  $region23: #{dice_per_class_loss.1} parent=0 // pred_check_branch
    %110 = sbr.rel (0) target = $region25
  $region24: #{dice_per_class_loss.1} parent=0 // pred_region
    _
  $region25: #{dice_per_class_loss.1} parent=0 // pred_fallthru
    _
  // Predicated region
  $region26: #{dice_per_class_loss.1} parent=0 // pred_check
    _
  $region27: #{dice_per_class_loss.1} parent=0 // pred_check_branch
    %112 = sbr.rel (0) target = $region29
  $region28: #{dice_per_class_loss.1} parent=0 // pred_region
    _
  $region29: #{dice_per_class_loss.1} parent=0 // pred_fallthru
    _

</llo_original>
